<compile_context>
chip_gen: v5e
topology: v5e:2x2
jax: 0.10.0
libtpu: 0.0.40
codegen_flags: <defaults>
</compile_context>

<pallas_src>
import functools

import jax
import jax.numpy as jnp
from jax.experimental import pallas as pl
from jax.experimental.pallas import tpu as pltpu


def _round_up(x, m):
    return ((x + m - 1) // m) * m


def _proj_bias_kernel(f_tile, w_ref, p_ref, b_ref, o_ref):
    # w_ref : (Npad, K) bf16   (VMEM resident across the grid)
    # p_ref : (f_tile, K, P) bf16
    # b_ref : (Npad, 1) f32
    # o_ref : (f_tile, Npad, P) f32
    w = w_ref[...]
    b = b_ref[...]
    for f in range(f_tile):  # static unroll over frames in this block
        acc = jnp.dot(w, p_ref[f], preferred_element_type=jnp.float32)
        o_ref[f] = (acc + b).astype(o_ref.dtype)


def _proj_kernel(f_tile, w_ref, p_ref, o_ref):
    w = w_ref[...]
    for f in range(f_tile):
        o_ref[f] = jnp.dot(
            w, p_ref[f], preferred_element_type=jnp.float32
        ).astype(o_ref.dtype)


def video_patch_embed(x, weight, bias=None):
    """Strided-conv patch embedding. x: (B, F, C, H, W) -> (B*F, N, Hp, Wp)."""
    B, F, C, H, W = x.shape
    N, Cw, ph, pw = weight.shape
    assert C == Cw and H % ph == 0 and W % pw == 0
    Hp, Wp = H // ph, W // pw
    K = C * ph * pw
    P = Hp * Wp
    BF = B * F

    # bf16 operands (MXU native); cast before the layout pass to halve traffic.
    xb = x.astype(jnp.bfloat16).reshape(BF, C, Hp, ph, Wp, pw)
    # Patch extraction, K-major per frame: (BF, C, ph, pw, Hp, Wp) -> (BF, K, P)
    patches = jnp.transpose(xb, (0, 1, 3, 5, 2, 4)).reshape(BF, K, P)

    # Sublane-align the embedding dim (N is the sublane axis of the output).
    n_pad = _round_up(N, 8)
    w_nk = weight.reshape(N, K)
    if n_pad != N:
        w_nk = jnp.pad(w_nk, ((0, n_pad - N), (0, 0)))
    w_nk = w_nk.astype(jnp.bfloat16)

    # Frames per grid step: big enough to amortize per-step pipeline overhead,
    # small enough that double-buffered in/out blocks fit VMEM on every chip.
    budget = 24 * 1024 * 1024
    per_frame = 2 * (K * P * 2) + 2 * (n_pad * P * 4)  # 2x buffered in + out
    f_tile = 1
    for ft in (16, 8, 4, 2, 1):
        if BF % ft == 0 and ft * per_frame <= budget:
            f_tile = ft
            break
    grid = (BF // f_tile,)

    in_specs = [
        pl.BlockSpec((n_pad, K), lambda i: (0, 0)),         # weight: resident
        pl.BlockSpec((f_tile, K, P), lambda i: (i, 0, 0)),  # patches: pipelined
    ]
    args = [w_nk, patches]
    if bias is not None:
        b = bias if n_pad == N else jnp.pad(bias, (0, n_pad - N))
        args.append(b.reshape(n_pad, 1).astype(jnp.float32))
        in_specs.append(pl.BlockSpec((n_pad, 1), lambda i: (0, 0)))
        kernel = functools.partial(_proj_bias_kernel, f_tile)
    else:
        kernel = functools.partial(_proj_kernel, f_tile)

    cost = pl.CostEstimate(
        flops=2 * BF * n_pad * K * P,
        transcendentals=0,
        bytes_accessed=int(patches.size) * 2 + int(w_nk.size) * 2
        + BF * n_pad * P * 4,
    )

    out = pl.pallas_call(
        kernel,
        out_shape=jax.ShapeDtypeStruct((BF, n_pad, P), jnp.float32),
        grid=grid,
        in_specs=in_specs,
        out_specs=pl.BlockSpec((f_tile, n_pad, P), lambda i: (i, 0, 0)),
        compiler_params=pltpu.CompilerParams(
            dimension_semantics=("parallel",),
            vmem_limit_bytes=48 * 1024 * 1024),
        cost_estimate=cost,
    )(*args)

    if n_pad != N:
        out = out[:, :N, :]
    # (BF, N, P) -> (BF, N, Hp, Wp): pure view, no HBM layout pass.
    return out.reshape(BF, N, Hp, Wp)


class VideoPatchEmbedPallas:
    """JAX/Pallas re-implementation of LaviLa's VideoPatchEmbed."""

    def __init__(self, img_size=16, patch_size=8, in_chans=3, embed_dim=32,
                 num_frames=2, ln_pre=False, key=None):
        self.img_size = (img_size, img_size)
        self.patch_size = (patch_size, patch_size)
        self.num_frames = num_frames
        self.embed_dim = embed_dim
        self.in_chans = in_chans
        self.num_patches = (img_size // patch_size) * (img_size // patch_size) * num_frames
        self.use_bias = not ln_pre

        if key is None:
            key = jax.random.PRNGKey(0)
        kw, kb = jax.random.split(key)
        # Conv2d weight layout: (embed_dim, in_chans, p, p), deterministic init.
        self.weight = 0.02 * jax.random.normal(
            kw, (embed_dim, in_chans, patch_size, patch_size), dtype=jnp.float32)
        self.bias = (0.02 * jax.random.normal(kb, (embed_dim,), dtype=jnp.float32)
                     if self.use_bias else None)

    def __call__(self, x):
        # x: (B, F, C, H, W) float32 (PyTorch convention).
        return video_patch_embed(x, self.weight, self.bias)


def _reference_forward(x, weight, bias):
    """Reference conv (NCHW) on bf16-rounded inputs, f32 accumulation."""
    B, F, C, H, W = x.shape
    x = x.reshape(B * F, C, H, W)
    ph, pw = weight.shape[2], weight.shape[3]
    x_r = x.astype(jnp.bfloat16).astype(jnp.float32)
    w_r = weight.astype(jnp.bfloat16).astype(jnp.float32)
    out = jax.lax.conv_general_dilated(
        x_r, w_r, window_strides=(ph, pw), padding="VALID",
        dimension_numbers=("NCHW", "OIHW", "NCHW"),
        precision=jax.lax.Precision.HIGHEST,
        preferred_element_type=jnp.float32)
    if bias is not None:
        out = out + bias.reshape(1, -1, 1, 1)
    return out


if __name__ == "__main__":
    key = jax.random.PRNGKey(0)
    k_x, k_p = jax.random.split(key)

    # Small shapes consistent with the module:
    # B=2, num_frames=2, C=3, 16x16 img, 8x8 patch, embed_dim=32
    B, F_, C, H, W = 2, 2, 3, 16, 16
    module = VideoPatchEmbedPallas(img_size=16, patch_size=8, in_chans=C,
                                   embed_dim=32, num_frames=F_, ln_pre=False,
                                   key=k_p)

    x = jax.random.normal(k_x, (B, F_, C, H, W), dtype=jnp.float32)

    out = module(x)
    out = jax.block_until_ready(out)

    ref = _reference_forward(x, module.weight, module.bias)
    assert out.shape == ref.shape == (B * F_, 32, H // 8, W // 8), out.shape
    # bf16 operands, f32 accumulation in both paths -> tight tolerance.
    assert jnp.allclose(out, ref, atol=2e-3, rtol=2e-3), "mismatch vs reference conv"

    # Also exercise the ln_pre=True (no-bias) path once.
    module_nb = VideoPatchEmbedPallas(img_size=16, patch_size=8, in_chans=C,
                                      embed_dim=32, num_frames=F_, ln_pre=True,
                                      key=k_p)
    out_nb = jax.block_until_ready(module_nb(x))
    ref_nb = _reference_forward(x, module_nb.weight, None)
    assert jnp.allclose(out_nb, ref_nb, atol=2e-3, rtol=2e-3), "mismatch (no bias)"

    print("KERNEL_OK")
</pallas_src>

<mosaic_0001>
module attributes {stable_mosaic.version = 11 : i64} {
  func.func @_proj_bias_kernel(%arg0: i32, %arg1: memref<32x192xbf16, #tpu.memory_space<vmem>>, %arg2: memref<4x192x4xbf16, #tpu.memory_space<vmem>>, %arg3: memref<32x1xf32, #tpu.memory_space<vmem>>, %arg4: memref<4x32x4xf32, #tpu.memory_space<vmem>>) attributes {dimension_semantics = [#tpu.dimension_semantics<parallel>], iteration_bounds = array<i64: 1>, scalar_prefetch = 0 : i64, scratch_operands = 0 : i64, tpu.core_type = #tpu.core_type<tc>, window_params = [{pipeline_mode = #tpu.pipeline_mode<synchronous>, transform_indices = @transform_0, window_bounds = array<i64: 32, 192>}, {transform_indices = @transform_1, window_bounds = array<i64: 4, 192, 4>}, {pipeline_mode = #tpu.pipeline_mode<synchronous>, transform_indices = @transform_2, window_bounds = array<i64: 32, 1>}, {transform_indices = @transform_3, window_bounds = array<i64: 4, 32, 4>}]} {
    %c0 = arith.constant 0 : index
    %c0_0 = arith.constant 0 : index
    %0 = vector.load %arg1[%c0, %c0_0] : memref<32x192xbf16, #tpu.memory_space<vmem>>, vector<32x192xbf16>
    %c0_1 = arith.constant 0 : index
    %c0_2 = arith.constant 0 : index
    %1 = vector.load %arg3[%c0_1, %c0_2] : memref<32x1xf32, #tpu.memory_space<vmem>>, vector<32x1xf32>
    %c0_3 = arith.constant 0 : index
    %c0_4 = arith.constant 0 : index
    %c0_5 = arith.constant 0 : index
    %2 = vector.load %arg2[%c0_3, %c0_4, %c0_5] : memref<4x192x4xbf16, #tpu.memory_space<vmem>>, vector<1x192x4xbf16>
    %3 = vector.shape_cast %2 : vector<1x192x4xbf16> to vector<192x4xbf16>
    %cst = arith.constant dense<0.000000e+00> : vector<32x4xf32>
    %4 = tpu.matmul %0, %3, %cst {dimension_numbers = #tpu.dot_dimension_numbers<[1], [0], [0], [1], [0, 0, 1, 1], [], []>} : vector<32x192xbf16>, vector<192x4xbf16>, vector<32x4xf32> -> vector<32x4xf32>
    %5 = vector.broadcast %1 : vector<32x1xf32> to vector<32x4xf32>
    %6 = arith.addf %4, %5 : vector<32x4xf32>
    %c0_6 = arith.constant 0 : index
    %c0_7 = arith.constant 0 : index
    %c0_8 = arith.constant 0 : index
    %7 = vector.load %arg4[%c0_6, %c0_7, %c0_8] : memref<4x32x4xf32, #tpu.memory_space<vmem>>, vector<1x32x4xf32>
    %8 = vector.shape_cast %7 : vector<1x32x4xf32> to vector<32x4xf32>
    %9 = vector.shape_cast %6 : vector<32x4xf32> to vector<1x32x4xf32>
    tpu.vector_store %arg4[%c0_6, %c0_7, %c0_8], %9 {strides = array<i32>} : memref<4x32x4xf32, #tpu.memory_space<vmem>>, vector<1x32x4xf32>,
    %c1 = arith.constant 1 : index
    %c0_9 = arith.constant 0 : index
    %c0_10 = arith.constant 0 : index
    %10 = vector.load %arg2[%c1, %c0_9, %c0_10] : memref<4x192x4xbf16, #tpu.memory_space<vmem>>, vector<1x192x4xbf16>
    %11 = vector.shape_cast %10 : vector<1x192x4xbf16> to vector<192x4xbf16>
    %cst_11 = arith.constant dense<0.000000e+00> : vector<32x4xf32>
    %12 = tpu.matmul %0, %11, %cst_11 {dimension_numbers = #tpu.dot_dimension_numbers<[1], [0], [0], [1], [0, 0, 1, 1], [], []>} : vector<32x192xbf16>, vector<192x4xbf16>, vector<32x4xf32> -> vector<32x4xf32>
    %13 = vector.broadcast %1 : vector<32x1xf32> to vector<32x4xf32>
    %14 = arith.addf %12, %13 : vector<32x4xf32>
    %c1_12 = arith.constant 1 : index
    %c0_13 = arith.constant 0 : index
    %c0_14 = arith.constant 0 : index
    %15 = vector.load %arg4[%c1_12, %c0_13, %c0_14] : memref<4x32x4xf32, #tpu.memory_space<vmem>>, vector<1x32x4xf32>
    %16 = vector.shape_cast %15 : vector<1x32x4xf32> to vector<32x4xf32>
    %17 = vector.shape_cast %14 : vector<32x4xf32> to vector<1x32x4xf32>
    tpu.vector_store %arg4[%c1_12, %c0_13, %c0_14], %17 {strides = array<i32>} : memref<4x32x4xf32, #tpu.memory_space<vmem>>, vector<1x32x4xf32>,
    %c2 = arith.constant 2 : index
    %c0_15 = arith.constant 0 : index
    %c0_16 = arith.constant 0 : index
    %18 = vector.load %arg2[%c2, %c0_15, %c0_16] : memref<4x192x4xbf16, #tpu.memory_space<vmem>>, vector<1x192x4xbf16>
    %19 = vector.shape_cast %18 : vector<1x192x4xbf16> to vector<192x4xbf16>
    %cst_17 = arith.constant dense<0.000000e+00> : vector<32x4xf32>
    %20 = tpu.matmul %0, %19, %cst_17 {dimension_numbers = #tpu.dot_dimension_numbers<[1], [0], [0], [1], [0, 0, 1, 1], [], []>} : vector<32x192xbf16>, vector<192x4xbf16>, vector<32x4xf32> -> vector<32x4xf32>
    %21 = vector.broadcast %1 : vector<32x1xf32> to vector<32x4xf32>
    %22 = arith.addf %20, %21 : vector<32x4xf32>
    %c2_18 = arith.constant 2 : index
    %c0_19 = arith.constant 0 : index
    %c0_20 = arith.constant 0 : index
    %23 = vector.load %arg4[%c2_18, %c0_19, %c0_20] : memref<4x32x4xf32, #tpu.memory_space<vmem>>, vector<1x32x4xf32>
    %24 = vector.shape_cast %23 : vector<1x32x4xf32> to vector<32x4xf32>
    %25 = vector.shape_cast %22 : vector<32x4xf32> to vector<1x32x4xf32>
    tpu.vector_store %arg4[%c2_18, %c0_19, %c0_20], %25 {strides = array<i32>} : memref<4x32x4xf32, #tpu.memory_space<vmem>>, vector<1x32x4xf32>,
    %c3 = arith.constant 3 : index
    %c0_21 = arith.constant 0 : index
    %c0_22 = arith.constant 0 : index
    %26 = vector.load %arg2[%c3, %c0_21, %c0_22] : memref<4x192x4xbf16, #tpu.memory_space<vmem>>, vector<1x192x4xbf16>
    %27 = vector.shape_cast %26 : vector<1x192x4xbf16> to vector<192x4xbf16>
    %cst_23 = arith.constant dense<0.000000e+00> : vector<32x4xf32>
    %28 = tpu.matmul %0, %27, %cst_23 {dimension_numbers = #tpu.dot_dimension_numbers<[1], [0], [0], [1], [0, 0, 1, 1], [], []>} : vector<32x192xbf16>, vector<192x4xbf16>, vector<32x4xf32> -> vector<32x4xf32>
    %29 = vector.broadcast %1 : vector<32x1xf32> to vector<32x4xf32>
    %30 = arith.addf %28, %29 : vector<32x4xf32>
    %c3_24 = arith.constant 3 : index
    %c0_25 = arith.constant 0 : index
    %c0_26 = arith.constant 0 : index
    %31 = vector.load %arg4[%c3_24, %c0_25, %c0_26] : memref<4x32x4xf32, #tpu.memory_space<vmem>>, vector<1x32x4xf32>
    %32 = vector.shape_cast %31 : vector<1x32x4xf32> to vector<32x4xf32>
    %33 = vector.shape_cast %30 : vector<32x4xf32> to vector<1x32x4xf32>
    tpu.vector_store %arg4[%c3_24, %c0_25, %c0_26], %33 {strides = array<i32>} : memref<4x32x4xf32, #tpu.memory_space<vmem>>, vector<1x32x4xf32>,
    return
  }
  func.func @transform_0(%arg0: i32) -> (i32, i32) {
    %c0_i32 = arith.constant 0 : i32
    %c0_i32_0 = arith.constant 0 : i32
    %c0_i32_1 = arith.constant 0 : i32
    return %c0_i32, %c0_i32_0 : i32, i32
  }
  func.func @transform_1(%arg0: i32) -> (i32, i32, i32) {
    %c0_i32 = arith.constant 0 : i32
    %c0_i32_0 = arith.constant 0 : i32
    %c0_i32_1 = arith.constant 0 : i32
    return %arg0, %c0_i32, %c0_i32_0 : i32, i32, i32
  }
  func.func @transform_2(%arg0: i32) -> (i32, i32) {
    %c0_i32 = arith.constant 0 : i32
    %c0_i32_0 = arith.constant 0 : i32
    %c0_i32_1 = arith.constant 0 : i32
    return %c0_i32, %c0_i32_0 : i32, i32
  }
  func.func @transform_3(%arg0: i32) -> (i32, i32, i32) {
    %c0_i32 = arith.constant 0 : i32
    %c0_i32_0 = arith.constant 0 : i32
    %c0_i32_1 = arith.constant 0 : i32
    return %arg0, %c0_i32, %c0_i32_0 : i32, i32, i32
  }
}

</mosaic_0001>

<llo_original>
// kernel: tpu_custom_call.1
$region0: #{tpu_custom_call.1}
  #allocation0 [shape = 'u32[]', space=smem, size = 0x4, offset = 0x4, fixed_abs, tag = 'smem constant byte address 0x4 - core index']
  #allocation1 [shape = 'u32[72,128]{1,0:T(1,128)}', space=vmem, size = 0x9000, scoped, tag = 'internal scratch']
  %s0 = inlined_call_operand.vmem [shape: bf16[32,192], index: 0, kind: input, shape index: {}]
  %s1 = inlined_call_operand.vmem [shape: bf16[4,192,4], index: 1, kind: input, shape index: {}]
  %s2 = inlined_call_operand.vmem [shape: f32[32,1], index: 2, kind: input, shape index: {}]
  %s3 = inlined_call_operand.vmem [shape: f32[4,32,4], index: 3, kind: output, shape index: {}]
  %s4 = sld [smem:[#allocation0]]
  $region22: #{tpu_custom_call.1} parent=0
    _
  %s6 = ssub.s32 1, %s4
  %s7 = scalar_select 0, %s6, %s4
  // Predicated region
  $region2: #{tpu_custom_call.1} parent=0 // pred_check
    _
  $region3: #{tpu_custom_call.1} parent=0 // pred_check_branch
    %9 = sbr.rel (0) target = $region5
  $region4: #{tpu_custom_call.1} parent=0 // pred_region
    _
  $region5: #{tpu_custom_call.1} parent=0 // pred_fallthru
    _
  // Predicated region
  $region6: #{tpu_custom_call.1} parent=0 // pred_check
    _
  $region7: #{tpu_custom_call.1} parent=0 // pred_check_branch
    %11 = sbr.rel (0) target = $region9
  $region8: #{tpu_custom_call.1} parent=0 // pred_region
    _
  $region9: #{tpu_custom_call.1} parent=0 // pred_fallthru
    _
  // Predicated region
  $region10: #{tpu_custom_call.1} parent=0 // pred_check
    _
  $region11: #{tpu_custom_call.1} parent=0 // pred_check_branch
    %13 = sbr.rel (0) target = $region13
  $region12: #{tpu_custom_call.1} parent=0 // pred_region
    _
  $region13: #{tpu_custom_call.1} parent=0 // pred_fallthru
    _
  %v15 = vld [vmem:[%s0] sm:$0xff]
  %v16 = vld [vmem:[%s0 + $0x8] sm:$0xff]
  %v17 = vld [vmem:[%s0 + $0x10] sm:$0xff]
  %v18 = vld [vmem:[%s0 + $0x18] sm:$0xff]
  %v19 = vld [vmem:[%s2] sm:$0xff]
  %v20 = vld [vmem:[%s2 + $0x8] sm:$0xff]
  %v21 = vld [vmem:[%s2 + $0x10] sm:$0xff]
  %v22 = vld [vmem:[%s2 + $0x18] sm:$0xff]
  %v23 = vld [vmem:[%s1] sm:$0xf]
  %v24 = vld [vmem:[%s1 + $0x4] sm:$0xf]
  %v25 = vld [vmem:[%s1 + $0x8] sm:$0xf]
  %v26 = vld [vmem:[%s1 + $0xc] sm:$0xf]
  %v27 = vld [vmem:[%s1 + $0x10] sm:$0xf]
  %v28 = vld [vmem:[%s1 + $0x14] sm:$0xf]
  %v29 = vld [vmem:[%s1 + $0x18] sm:$0xf]
  %v30 = vld [vmem:[%s1 + $0x1c] sm:$0xf]
  %v31 = vld [vmem:[%s1 + $0x20] sm:$0xf]
  %v32 = vld [vmem:[%s1 + $0x24] sm:$0xf]
  %v33 = vld [vmem:[%s1 + $0x28] sm:$0xf]
  %v34 = vld [vmem:[%s1 + $0x2c] sm:$0xf]
  %v35 = vld [vmem:[%s1 + $0x30] sm:$0xf]
  %v36 = vld [vmem:[%s1 + $0x34] sm:$0xf]
  %v37 = vld [vmem:[%s1 + $0x38] sm:$0xf]
  %v38 = vld [vmem:[%s1 + $0x3c] sm:$0xf]
  %v39 = vld [vmem:[%s1 + $0x40] sm:$0xf]
  %v40 = vld [vmem:[%s1 + $0x44] sm:$0xf]
  %v41 = vld [vmem:[%s1 + $0x48] sm:$0xf]
  %v42 = vld [vmem:[%s1 + $0x4c] sm:$0xf]
  %v43 = vld [vmem:[%s1 + $0x50] sm:$0xf]
  %v44 = vld [vmem:[%s1 + $0x54] sm:$0xf]
  %v45 = vld [vmem:[%s1 + $0x58] sm:$0xf]
  %v46 = vld [vmem:[%s1 + $0x5c] sm:$0xf]
  %48 = vset.pattern.permute.xlu0 0
  %49 = vperm.xlu0 %48, %v19
  %v50 = vpop.permute.xlu0 %49
  %53 = vset.pattern.permute.xlu0 0
  %54 = vperm.xlu0 %53, %v20
  %v55 = vpop.permute.xlu0 %54
  %58 = vset.pattern.permute.xlu0 0
  %59 = vperm.xlu0 %58, %v21
  %v60 = vpop.permute.xlu0 %59
  %63 = vset.pattern.permute.xlu0 0
  %64 = vperm.xlu0 %63, %v22
  %v65 = vpop.permute.xlu0 %64
  %v71 = vunpack.c.l.b16 %v15
  %v72 = vunpack.c.h.b16 %v15
  %v73 = vunpack.c.l.b16 %v16
  %v74 = vunpack.c.h.b16 %v16
  %v75 = vunpack.c.l.b16 %v17
  %v76 = vunpack.c.h.b16 %v17
  %v77 = vunpack.c.l.b16 %v18
  %v78 = vunpack.c.h.b16 %v18
  %v79 = vpack.c.b16 %v73, %v71
  %v80 = vpack.c.b16 %v74, %v72
  %v81 = vpack.c.b16 %v77, %v75
  %v82 = vpack.c.b16 %v78, %v76
  %v109 = vunpack.c.l.b16 %v23
  %v110 = vunpack.c.l.b16 %v24
  %v111 = vunpack.c.l.b16 %v25
  %v112 = vunpack.c.l.b16 %v26
  %v113 = vunpack.c.l.b16 %v27
  %v114 = vunpack.c.l.b16 %v28
  %v115 = vunpack.c.l.b16 %v29
  %v116 = vunpack.c.l.b16 %v30
  %v117 = vunpack.c.l.b16 %v31
  %v118 = vunpack.c.l.b16 %v32
  %v119 = vunpack.c.l.b16 %v33
  %v120 = vunpack.c.l.b16 %v34
  %v121 = vunpack.c.l.b16 %v35
  %v122 = vunpack.c.l.b16 %v36
  %v123 = vunpack.c.l.b16 %v37
  %v124 = vunpack.c.l.b16 %v38
  %v125 = vunpack.c.l.b16 %v39
  %v126 = vunpack.c.l.b16 %v40
  %v127 = vunpack.c.l.b16 %v41
  %v128 = vunpack.c.l.b16 %v42
  %v129 = vunpack.c.l.b16 %v43
  %v130 = vunpack.c.l.b16 %v44
  %v131 = vunpack.c.l.b16 %v45
  %v132 = vunpack.c.l.b16 %v46
  %v133 = vpack.c.b16 %v110, %v109
  %v134 = vpack.c.b16 %v112, %v111
  %v135 = vpack.c.b16 %v114, %v113
  %v136 = vpack.c.b16 %v116, %v115
  %v137 = vpack.c.b16 %v118, %v117
  %v138 = vpack.c.b16 %v120, %v119
  %v139 = vpack.c.b16 %v122, %v121
  %v140 = vpack.c.b16 %v124, %v123
  %v141 = vpack.c.b16 %v126, %v125
  %v142 = vpack.c.b16 %v128, %v127
  %v143 = vpack.c.b16 %v130, %v129
  %v144 = vpack.c.b16 %v132, %v131
  %vm157 = vcmask 523264
  %v159 = vsel %vm157, %v80, 0
  %v162 = vsel %vm157, %v82, 0
  %164 = vmatpush.bf16.msra.mxu0 %v140
  %165 = vmatpush.bf16.msra.mxu0 %v139
  %166 = vmatpush.bf16.msra.mxu0 %v138
  %167 = vmatpush.bf16.msra.mxu0 %v137
  %168 = vmatpush.bf16.msra.mxu0 %v136
  %169 = vmatpush.bf16.msra.mxu0 %v135
  %170 = vmatpush.bf16.msra.mxu0 %v134
  %171 = vmatpush.bf16.msra.mxu0 %v133
  %172 = vmatmul.bf16.gmra.mxu0 %v79
  %v173 = vpop.f32.mrf.mxu0
  %v174 = vadd.f32 %v50, %v173
  %v175 = vpop.f32.mrf.mxu0
  %v176 = vadd.f32 %v55, %v175
  %177 = vmatmul.bf16.gmra.mxu0 %v81
  %v178 = vpop.f32.mrf.mxu0
  %v179 = vadd.f32 %v60, %v178
  %v180 = vpop.f32.mrf.mxu0
  %v181 = vadd.f32 %v65, %v180
  %182 = vdwg.mxu0
  %183 = vmatpush.bf16.msra.mxu0 0
  %184 = vmatpush.bf16.msra.mxu0 0
  %185 = vmatpush.bf16.msra.mxu0 0
  %186 = vmatpush.bf16.msra.mxu0 0
  %187 = vmatpush.bf16.msra.mxu0 %v144
  %188 = vmatpush.bf16.msra.mxu0 %v143
  %189 = vmatpush.bf16.msra.mxu0 %v142
  %190 = vmatpush.bf16.msra.mxu0 %v141
  %191 = vmatmul.bf16.gmra.mxu0 %v159
  %v192 = vpop.f32.mrf.mxu0
  %v193 = vadd.f32 %v174, %v192
  %v194 = vpop.f32.mrf.mxu0
  %v195 = vadd.f32 %v176, %v194
  %196 = vmatmul.bf16.gmra.mxu0 %v162
  %v197 = vpop.f32.mrf.mxu0
  %v198 = vadd.f32 %v179, %v197
  %v199 = vpop.f32.mrf.mxu0
  %v200 = vadd.f32 %v181, %v199
  %201 = vdwg.mxu0
  %vm202 = vcmask 31744
  %203 = vst.msk [vmem:[%s3] sm:$0xff] %vm202, %v193
  %204 = vst.msk [vmem:[%s3 + $0x8] sm:$0xff] %vm202, %v195
  %205 = vst.msk [vmem:[%s3 + $0x10] sm:$0xff] %vm202, %v198
  %206 = vst.msk [vmem:[%s3 + $0x18] sm:$0xff] %vm202, %v200
  %s207 = scalar_lea.vmem %s1, 96
  %v208 = vld [vmem:[%s207] sm:$0xf]
  %v209 = vld [vmem:[%s207 + $0x4] sm:$0xf]
  %v210 = vld [vmem:[%s207 + $0x8] sm:$0xf]
  %v211 = vld [vmem:[%s207 + $0xc] sm:$0xf]
  %v212 = vld [vmem:[%s207 + $0x10] sm:$0xf]
  %v213 = vld [vmem:[%s207 + $0x14] sm:$0xf]
  %v214 = vld [vmem:[%s207 + $0x18] sm:$0xf]
  %v215 = vld [vmem:[%s207 + $0x1c] sm:$0xf]
  %v216 = vld [vmem:[%s207 + $0x20] sm:$0xf]
  %v217 = vld [vmem:[%s207 + $0x24] sm:$0xf]
  %v218 = vld [vmem:[%s207 + $0x28] sm:$0xf]
  %v219 = vld [vmem:[%s207 + $0x2c] sm:$0xf]
  %v220 = vld [vmem:[%s207 + $0x30] sm:$0xf]
  %v221 = vld [vmem:[%s207 + $0x34] sm:$0xf]
  %v222 = vld [vmem:[%s207 + $0x38] sm:$0xf]
  %v223 = vld [vmem:[%s207 + $0x3c] sm:$0xf]
  %v224 = vld [vmem:[%s207 + $0x40] sm:$0xf]
  %v225 = vld [vmem:[%s207 + $0x44] sm:$0xf]
  %v226 = vld [vmem:[%s207 + $0x48] sm:$0xf]
  %v227 = vld [vmem:[%s207 + $0x4c] sm:$0xf]
  %v228 = vld [vmem:[%s207 + $0x50] sm:$0xf]
  %v229 = vld [vmem:[%s207 + $0x54] sm:$0xf]
  %v230 = vld [vmem:[%s207 + $0x58] sm:$0xf]
  %v231 = vld [vmem:[%s207 + $0x5c] sm:$0xf]
  %v256 = vunpack.c.l.b16 %v208
  %v257 = vunpack.c.l.b16 %v209
  %v258 = vunpack.c.l.b16 %v210
  %v259 = vunpack.c.l.b16 %v211
  %v260 = vunpack.c.l.b16 %v212
  %v261 = vunpack.c.l.b16 %v213
  %v262 = vunpack.c.l.b16 %v214
  %v263 = vunpack.c.l.b16 %v215
  %v264 = vunpack.c.l.b16 %v216
  %v265 = vunpack.c.l.b16 %v217
  %v266 = vunpack.c.l.b16 %v218
  %v267 = vunpack.c.l.b16 %v219
  %v268 = vunpack.c.l.b16 %v220
  %v269 = vunpack.c.l.b16 %v221
  %v270 = vunpack.c.l.b16 %v222
  %v271 = vunpack.c.l.b16 %v223
  %v272 = vunpack.c.l.b16 %v224
  %v273 = vunpack.c.l.b16 %v225
  %v274 = vunpack.c.l.b16 %v226
  %v275 = vunpack.c.l.b16 %v227
  %v276 = vunpack.c.l.b16 %v228
  %v277 = vunpack.c.l.b16 %v229
  %v278 = vunpack.c.l.b16 %v230
  %v279 = vunpack.c.l.b16 %v231
  %v280 = vpack.c.b16 %v257, %v256
  %v281 = vpack.c.b16 %v259, %v258
  %v282 = vpack.c.b16 %v261, %v260
  %v283 = vpack.c.b16 %v263, %v262
  %v284 = vpack.c.b16 %v265, %v264
  %v285 = vpack.c.b16 %v267, %v266
  %v286 = vpack.c.b16 %v269, %v268
  %v287 = vpack.c.b16 %v271, %v270
  %v288 = vpack.c.b16 %v273, %v272
  %v289 = vpack.c.b16 %v275, %v274
  %v290 = vpack.c.b16 %v277, %v276
  %v291 = vpack.c.b16 %v279, %v278
  %304 = vmatpush.bf16.msra.mxu0 %v287
  %305 = vmatpush.bf16.msra.mxu0 %v286
  %306 = vmatpush.bf16.msra.mxu0 %v285
  %307 = vmatpush.bf16.msra.mxu0 %v284
  %308 = vmatpush.bf16.msra.mxu0 %v283
  %309 = vmatpush.bf16.msra.mxu0 %v282
  %310 = vmatpush.bf16.msra.mxu0 %v281
  %311 = vmatpush.bf16.msra.mxu0 %v280
  %312 = vmatmul.bf16.gmra.mxu0 %v79
  %v313 = vpop.f32.mrf.mxu0
  %v314 = vadd.f32 %v50, %v313
  %v315 = vpop.f32.mrf.mxu0
  %v316 = vadd.f32 %v55, %v315
  %317 = vmatmul.bf16.gmra.mxu0 %v81
  %v318 = vpop.f32.mrf.mxu0
  %v319 = vadd.f32 %v60, %v318
  %v320 = vpop.f32.mrf.mxu0
  %v321 = vadd.f32 %v65, %v320
  %322 = vdwg.mxu0
  %323 = vmatpush.bf16.msra.mxu0 0
  %324 = vmatpush.bf16.msra.mxu0 0
  %325 = vmatpush.bf16.msra.mxu0 0
  %326 = vmatpush.bf16.msra.mxu0 0
  %327 = vmatpush.bf16.msra.mxu0 %v291
  %328 = vmatpush.bf16.msra.mxu0 %v290
  %329 = vmatpush.bf16.msra.mxu0 %v289
  %330 = vmatpush.bf16.msra.mxu0 %v288
  %331 = vmatmul.bf16.gmra.mxu0 %v159
  %v332 = vpop.f32.mrf.mxu0
  %v333 = vadd.f32 %v314, %v332
  %v334 = vpop.f32.mrf.mxu0
  %v335 = vadd.f32 %v316, %v334
  %336 = vmatmul.bf16.gmra.mxu0 %v162
  %v337 = vpop.f32.mrf.mxu0
  %v338 = vadd.f32 %v319, %v337
  %v339 = vpop.f32.mrf.mxu0
  %v340 = vadd.f32 %v321, %v339
  %341 = vdwg.mxu0
  %s342 = scalar_lea.vmem %s3, 32
  %343 = vst.msk [vmem:[%s342] sm:$0xff] %vm202, %v333
  %344 = vst.msk [vmem:[%s342 + $0x8] sm:$0xff] %vm202, %v335
  %345 = vst.msk [vmem:[%s342 + $0x10] sm:$0xff] %vm202, %v338
  %346 = vst.msk [vmem:[%s342 + $0x18] sm:$0xff] %vm202, %v340
  %s347 = scalar_lea.vmem %s1, 192
  %v348 = vld [vmem:[%s347] sm:$0xf]
  %v349 = vld [vmem:[%s347 + $0x4] sm:$0xf]
  %v350 = vld [vmem:[%s347 + $0x8] sm:$0xf]
  %v351 = vld [vmem:[%s347 + $0xc] sm:$0xf]
  %v352 = vld [vmem:[%s347 + $0x10] sm:$0xf]
  %v353 = vld [vmem:[%s347 + $0x14] sm:$0xf]
  %v354 = vld [vmem:[%s347 + $0x18] sm:$0xf]
  %v355 = vld [vmem:[%s347 + $0x1c] sm:$0xf]
  %v356 = vld [vmem:[%s347 + $0x20] sm:$0xf]
  %v357 = vld [vmem:[%s347 + $0x24] sm:$0xf]
  %v358 = vld [vmem:[%s347 + $0x28] sm:$0xf]
  %v359 = vld [vmem:[%s347 + $0x2c] sm:$0xf]
  %v360 = vld [vmem:[%s347 + $0x30] sm:$0xf]
  %v361 = vld [vmem:[%s347 + $0x34] sm:$0xf]
  %v362 = vld [vmem:[%s347 + $0x38] sm:$0xf]
  %v363 = vld [vmem:[%s347 + $0x3c] sm:$0xf]
  %v364 = vld [vmem:[%s347 + $0x40] sm:$0xf]
  %v365 = vld [vmem:[%s347 + $0x44] sm:$0xf]
  %v366 = vld [vmem:[%s347 + $0x48] sm:$0xf]
  %v367 = vld [vmem:[%s347 + $0x4c] sm:$0xf]
  %v368 = vld [vmem:[%s347 + $0x50] sm:$0xf]
  %v369 = vld [vmem:[%s347 + $0x54] sm:$0xf]
  %v370 = vld [vmem:[%s347 + $0x58] sm:$0xf]
  %v371 = vld [vmem:[%s347 + $0x5c] sm:$0xf]
  %v396 = vunpack.c.l.b16 %v348
  %v397 = vunpack.c.l.b16 %v349
  %v398 = vunpack.c.l.b16 %v350
  %v399 = vunpack.c.l.b16 %v351
  %v400 = vunpack.c.l.b16 %v352
  %v401 = vunpack.c.l.b16 %v353
  %v402 = vunpack.c.l.b16 %v354
  %v403 = vunpack.c.l.b16 %v355
  %v404 = vunpack.c.l.b16 %v356
  %v405 = vunpack.c.l.b16 %v357
  %v406 = vunpack.c.l.b16 %v358
  %v407 = vunpack.c.l.b16 %v359
  %v408 = vunpack.c.l.b16 %v360
  %v409 = vunpack.c.l.b16 %v361
  %v410 = vunpack.c.l.b16 %v362
  %v411 = vunpack.c.l.b16 %v363
  %v412 = vunpack.c.l.b16 %v364
  %v413 = vunpack.c.l.b16 %v365
  %v414 = vunpack.c.l.b16 %v366
  %v415 = vunpack.c.l.b16 %v367
  %v416 = vunpack.c.l.b16 %v368
  %v417 = vunpack.c.l.b16 %v369
  %v418 = vunpack.c.l.b16 %v370
  %v419 = vunpack.c.l.b16 %v371
  %v420 = vpack.c.b16 %v397, %v396
  %v421 = vpack.c.b16 %v399, %v398
  %v422 = vpack.c.b16 %v401, %v400
  %v423 = vpack.c.b16 %v403, %v402
  %v424 = vpack.c.b16 %v405, %v404
  %v425 = vpack.c.b16 %v407, %v406
  %v426 = vpack.c.b16 %v409, %v408
  %v427 = vpack.c.b16 %v411, %v410
  %v428 = vpack.c.b16 %v413, %v412
  %v429 = vpack.c.b16 %v415, %v414
  %v430 = vpack.c.b16 %v417, %v416
  %v431 = vpack.c.b16 %v419, %v418
  %444 = vmatpush.bf16.msra.mxu0 %v427
  %445 = vmatpush.bf16.msra.mxu0 %v426
  %446 = vmatpush.bf16.msra.mxu0 %v425
  %447 = vmatpush.bf16.msra.mxu0 %v424
  %448 = vmatpush.bf16.msra.mxu0 %v423
  %449 = vmatpush.bf16.msra.mxu0 %v422
  %450 = vmatpush.bf16.msra.mxu0 %v421
  %451 = vmatpush.bf16.msra.mxu0 %v420
  %452 = vmatmul.bf16.gmra.mxu0 %v79
  %v453 = vpop.f32.mrf.mxu0
  %v454 = vadd.f32 %v50, %v453
  %v455 = vpop.f32.mrf.mxu0
  %v456 = vadd.f32 %v55, %v455
  %457 = vmatmul.bf16.gmra.mxu0 %v81
  %v458 = vpop.f32.mrf.mxu0
  %v459 = vadd.f32 %v60, %v458
  %v460 = vpop.f32.mrf.mxu0
  %v461 = vadd.f32 %v65, %v460
  %462 = vdwg.mxu0
  %463 = vmatpush.bf16.msra.mxu0 0
  %464 = vmatpush.bf16.msra.mxu0 0
  %465 = vmatpush.bf16.msra.mxu0 0
  %466 = vmatpush.bf16.msra.mxu0 0
  %467 = vmatpush.bf16.msra.mxu0 %v431
  %468 = vmatpush.bf16.msra.mxu0 %v430
  %469 = vmatpush.bf16.msra.mxu0 %v429
  %470 = vmatpush.bf16.msra.mxu0 %v428
  %471 = vmatmul.bf16.gmra.mxu0 %v159
  %v472 = vpop.f32.mrf.mxu0
  %v473 = vadd.f32 %v454, %v472
  %v474 = vpop.f32.mrf.mxu0
  %v475 = vadd.f32 %v456, %v474
  %476 = vmatmul.bf16.gmra.mxu0 %v162
  %v477 = vpop.f32.mrf.mxu0
  %v478 = vadd.f32 %v459, %v477
  %v479 = vpop.f32.mrf.mxu0
  %v480 = vadd.f32 %v461, %v479
  %481 = vdwg.mxu0
  %s482 = scalar_lea.vmem %s3, 64
  %483 = vst.msk [vmem:[%s482] sm:$0xff] %vm202, %v473
  %484 = vst.msk [vmem:[%s482 + $0x8] sm:$0xff] %vm202, %v475
  %485 = vst.msk [vmem:[%s482 + $0x10] sm:$0xff] %vm202, %v478
  %486 = vst.msk [vmem:[%s482 + $0x18] sm:$0xff] %vm202, %v480
  %s487 = scalar_lea.vmem %s1, 288
  %v488 = vld [vmem:[%s487] sm:$0xf]
  %v489 = vld [vmem:[%s487 + $0x4] sm:$0xf]
  %v490 = vld [vmem:[%s487 + $0x8] sm:$0xf]
  %v491 = vld [vmem:[%s487 + $0xc] sm:$0xf]
  %v492 = vld [vmem:[%s487 + $0x10] sm:$0xf]
  %v493 = vld [vmem:[%s487 + $0x14] sm:$0xf]
  %v494 = vld [vmem:[%s487 + $0x18] sm:$0xf]
  %v495 = vld [vmem:[%s487 + $0x1c] sm:$0xf]
  %v496 = vld [vmem:[%s487 + $0x20] sm:$0xf]
  %v497 = vld [vmem:[%s487 + $0x24] sm:$0xf]
  %v498 = vld [vmem:[%s487 + $0x28] sm:$0xf]
  %v499 = vld [vmem:[%s487 + $0x2c] sm:$0xf]
  %v500 = vld [vmem:[%s487 + $0x30] sm:$0xf]
  %v501 = vld [vmem:[%s487 + $0x34] sm:$0xf]
  %v502 = vld [vmem:[%s487 + $0x38] sm:$0xf]
  %v503 = vld [vmem:[%s487 + $0x3c] sm:$0xf]
  %v504 = vld [vmem:[%s487 + $0x40] sm:$0xf]
  %v505 = vld [vmem:[%s487 + $0x44] sm:$0xf]
  %v506 = vld [vmem:[%s487 + $0x48] sm:$0xf]
  %v507 = vld [vmem:[%s487 + $0x4c] sm:$0xf]
  %v508 = vld [vmem:[%s487 + $0x50] sm:$0xf]
  %v509 = vld [vmem:[%s487 + $0x54] sm:$0xf]
  %v510 = vld [vmem:[%s487 + $0x58] sm:$0xf]
  %v511 = vld [vmem:[%s487 + $0x5c] sm:$0xf]
  %v536 = vunpack.c.l.b16 %v488
  %v537 = vunpack.c.l.b16 %v489
  %v538 = vunpack.c.l.b16 %v490
  %v539 = vunpack.c.l.b16 %v491
  %v540 = vunpack.c.l.b16 %v492
  %v541 = vunpack.c.l.b16 %v493
  %v542 = vunpack.c.l.b16 %v494
  %v543 = vunpack.c.l.b16 %v495
  %v544 = vunpack.c.l.b16 %v496
  %v545 = vunpack.c.l.b16 %v497
  %v546 = vunpack.c.l.b16 %v498
  %v547 = vunpack.c.l.b16 %v499
  %v548 = vunpack.c.l.b16 %v500
  %v549 = vunpack.c.l.b16 %v501
  %v550 = vunpack.c.l.b16 %v502
  %v551 = vunpack.c.l.b16 %v503
  %v552 = vunpack.c.l.b16 %v504
  %v553 = vunpack.c.l.b16 %v505
  %v554 = vunpack.c.l.b16 %v506
  %v555 = vunpack.c.l.b16 %v507
  %v556 = vunpack.c.l.b16 %v508
  %v557 = vunpack.c.l.b16 %v509
  %v558 = vunpack.c.l.b16 %v510
  %v559 = vunpack.c.l.b16 %v511
  %v560 = vpack.c.b16 %v537, %v536
  %v561 = vpack.c.b16 %v539, %v538
  %v562 = vpack.c.b16 %v541, %v540
  %v563 = vpack.c.b16 %v543, %v542
  %v564 = vpack.c.b16 %v545, %v544
  %v565 = vpack.c.b16 %v547, %v546
  %v566 = vpack.c.b16 %v549, %v548
  %v567 = vpack.c.b16 %v551, %v550
  %v568 = vpack.c.b16 %v553, %v552
  %v569 = vpack.c.b16 %v555, %v554
  %v570 = vpack.c.b16 %v557, %v556
  %v571 = vpack.c.b16 %v559, %v558
  %584 = vmatpush.bf16.msra.mxu0 %v567
  %585 = vmatpush.bf16.msra.mxu0 %v566
  %586 = vmatpush.bf16.msra.mxu0 %v565
  %587 = vmatpush.bf16.msra.mxu0 %v564
  %588 = vmatpush.bf16.msra.mxu0 %v563
  %589 = vmatpush.bf16.msra.mxu0 %v562
  %590 = vmatpush.bf16.msra.mxu0 %v561
  %591 = vmatpush.bf16.msra.mxu0 %v560
  %592 = vmatmul.bf16.gmra.mxu0 %v79
  %v593 = vpop.f32.mrf.mxu0
  %v594 = vadd.f32 %v50, %v593
  %v595 = vpop.f32.mrf.mxu0
  %v596 = vadd.f32 %v55, %v595
  %597 = vmatmul.bf16.gmra.mxu0 %v81
  %v598 = vpop.f32.mrf.mxu0
  %v599 = vadd.f32 %v60, %v598
  %v600 = vpop.f32.mrf.mxu0
  %v601 = vadd.f32 %v65, %v600
  %602 = vdwg.mxu0
  %603 = vmatpush.bf16.msra.mxu0 0
  %604 = vmatpush.bf16.msra.mxu0 0
  %605 = vmatpush.bf16.msra.mxu0 0
  %606 = vmatpush.bf16.msra.mxu0 0
  %607 = vmatpush.bf16.msra.mxu0 %v571
  %608 = vmatpush.bf16.msra.mxu0 %v570
  %609 = vmatpush.bf16.msra.mxu0 %v569
  %610 = vmatpush.bf16.msra.mxu0 %v568
  %611 = vmatmul.bf16.gmra.mxu0 %v159
  %v612 = vpop.f32.mrf.mxu0
  %v613 = vadd.f32 %v594, %v612
  %v614 = vpop.f32.mrf.mxu0
  %v615 = vadd.f32 %v596, %v614
  %616 = vmatmul.bf16.gmra.mxu0 %v162
  %v617 = vpop.f32.mrf.mxu0
  %v618 = vadd.f32 %v599, %v617
  %v619 = vpop.f32.mrf.mxu0
  %v620 = vadd.f32 %v601, %v619
  %621 = vdwg.mxu0
  %s622 = scalar_lea.vmem %s3, 96
  %623 = vst.msk [vmem:[%s622] sm:$0xff] %vm202, %v613
  %624 = vst.msk [vmem:[%s622 + $0x8] sm:$0xff] %vm202, %v615
  %625 = vst.msk [vmem:[%s622 + $0x10] sm:$0xff] %vm202, %v618
  %626 = vst.msk [vmem:[%s622 + $0x18] sm:$0xff] %vm202, %v620
  // Predicated region
  $region14: #{tpu_custom_call.1} parent=0 // pred_check
    _
  $region15: #{tpu_custom_call.1} parent=0 // pred_check_branch
    %628 = sbr.rel (0) target = $region17
  $region16: #{tpu_custom_call.1} parent=0 // pred_region
    _
  $region17: #{tpu_custom_call.1} parent=0 // pred_fallthru
    _
  // Predicated region
  $region18: #{tpu_custom_call.1} parent=0 // pred_check
    _
  $region19: #{tpu_custom_call.1} parent=0 // pred_check_branch
    %630 = sbr.rel (0) target = $region21
  $region20: #{tpu_custom_call.1} parent=0 // pred_region
    _
  $region21: #{tpu_custom_call.1} parent=0 // pred_fallthru
    _

</llo_original>
